<compile_context>
chip_gen: v5e
topology: v5e:2x2
jax: 0.10.0
libtpu: 0.0.40
codegen_flags: <defaults>
</compile_context>

<pallas_src>
import functools

import jax
import jax.numpy as jnp
from jax.experimental import pallas as pl
from jax.experimental.pallas import tpu as pltpu


# ------------------------------- helpers ----------------------------------- #

def _round_up(x, m):
    return ((x + m - 1) // m) * m


def _pick_batch_tile(B_pad, bm):
    """Batch-lane tile size. B_pad is a multiple of 128."""
    bm_eff = min(bm, B_pad)
    # v7x has 2 TensorCores/chip: if a single block would swallow the whole batch,
    # split it in two (on a 128-lane boundary) so dimension_semantics=("parallel",)
    # can shard across both cores.  No-op on 1-TC chips (v5e/v6e) or on failure.
    if bm_eff == B_pad and B_pad >= 256 and B_pad % 256 == 0:
        try:
            if int(getattr(pltpu.get_tpu_info(), "num_cores", 1) or 1) >= 2:
                bm_eff = B_pad // 2
        except Exception:
            pass
    return bm_eff


# ----------------------------- Pallas kernel -------------------------------- #

def _fused_mlp_kernel(n_hidden, has_out, x_ref, *refs):
    """Fused transposed MLP.

    x_ref: (Din, bm) block of x^T, compute dtype (bf16 or f32).
    refs layout: [W'_0^T, shift'_0^T, ..., W'_{n-1}^T, shift'_{n-1}^T,
                  (W_out8, b_out if has_out), o_ref]
    All weights use constant index_maps so they are DMA'd once and stay in VMEM.
    Output block is (1, bm) (or (d_last, bm) when there is no output layer) —
    lane-dense along the batch dimension.
    """
    o_ref = refs[-1]
    cdtype = x_ref.dtype
    h = x_ref[...]                                  # (Din, bm), compute dtype
    hf = h.astype(jnp.float32)                      # only used if n_hidden == 0
    i = 0
    for _ in range(n_hidden):
        w_ref, s_ref = refs[i], refs[i + 1]
        i += 2
        acc = jnp.dot(w_ref[...], h, preferred_element_type=jnp.float32)
        hf = jnp.maximum(acc + s_ref[...], 0.0)     # (d_out, bm), f32
        h = hf.astype(cdtype)                       # feed next MXU matmul
    if has_out:
        w_ref, b_ref = refs[i], refs[i + 1]
        # w_ref is (8, d_last): row 0 = real weight row, rows 1..7 = 0.  Keeps the
        # matmul sublane-aligned; slice row 0 so the HBM store stays (1, bm).
        y8 = jnp.dot(w_ref[...], hf, preferred_element_type=jnp.float32)  # (8, bm)
        o_ref[...] = (y8[0:1, :] + b_ref[...]).astype(o_ref.dtype)
    else:
        o_ref[...] = hf.astype(o_ref.dtype)


# ----------------------------- parameter setup ------------------------------ #

def init_mlp_params(key, input_dim, embed_dims, output_layer=True,
                    dtype=jnp.float32):
    """Deterministic synthetic params, same shapes/roles as the torch module."""
    params = {"hidden": [], "out": None}
    d_in = input_dim
    for d_out in embed_dims:
        key, kw, kb, kg, kbe, krm, krv = jax.random.split(key, 7)
        params["hidden"].append(dict(
            w=jax.random.normal(kw, (d_in, d_out), dtype) * 0.05,   # (in, out) == torch W.T
            b=jax.random.normal(kb, (1, d_out), dtype) * 0.05,
            gamma=1.0 + 0.1 * jax.random.normal(kg, (1, d_out), dtype),
            beta=0.1 * jax.random.normal(kbe, (1, d_out), dtype),
            running_mean=0.1 * jax.random.normal(krm, (1, d_out), dtype),
            running_var=1.0 + 0.1 * jax.random.uniform(krv, (1, d_out), dtype),
        ))
        d_in = d_out
    if output_layer:
        key, kw, kb = jax.random.split(key, 3)
        params["out"] = dict(w=jax.random.normal(kw, (d_in, 1), dtype) * 0.05,
                             b=jax.random.normal(kb, (1, 1), dtype) * 0.05)
    return params


def fold_mlp_params(params, *, eps=1e-5, compute_dtype=jnp.bfloat16):
    """Fold eval-mode BN + Linear bias into transposed weights.

    Hidden weights are stored as W'^T (d_out, d_in) in `compute_dtype` (bf16
    halves the streamed/held bytes; they are VMEM-resident so this is mainly a
    numerics choice).  Shifts and the output layer stay f32 (added to the f32
    accumulator).  The output weight row is zero-padded to 8 sublanes.
    """
    folded = {"hidden": [], "out": None}
    for lyr in params["hidden"]:
        scale = lyr["gamma"] / jnp.sqrt(lyr["running_var"] + eps)    # (1, d_out)
        shift = lyr["beta"] - lyr["running_mean"] * scale            # (1, d_out)
        w_t = (lyr["w"] * scale).T.astype(compute_dtype)             # (d_out, d_in)
        s_t = (lyr["b"] * scale + shift).T.astype(jnp.float32)       # (d_out, 1)
        folded["hidden"].append((w_t, s_t))
    if params["out"] is not None:
        w8 = jnp.pad(params["out"]["w"].T, ((0, 7), (0, 0))).astype(jnp.float32)  # (8, d_last)
        b = params["out"]["b"].astype(jnp.float32)                   # (1, 1)
        folded["out"] = (w8, b)
    return folded


# ----------------------------- MLP forward ---------------------------------- #

def mlp_forward(folded, x, *, bm=512):
    """Single fused pallas_call on x^T. Dropout is identity (eval mode)."""
    # TODO(synk): training-mode Dropout / batch-statistics BatchNorm not implemented
    #             (inference semantics only).
    B, Din = x.shape
    n_hidden = len(folded["hidden"])
    has_out = folded["out"] is not None
    cdtype = folded["hidden"][0][0].dtype if n_hidden else jnp.float32

    # Batch lives on lanes -> pad only to a multiple of 128 (not of bm).
    B_pad = _round_up(B, 128)
    bm_eff = _pick_batch_tile(B_pad, bm)
    grid = pl.cdiv(B_pad, bm_eff)          # partial final block handled by Pallas

    # One wrapper pass: transpose + (optional) bf16 cast + zero-pad dead lanes.
    x_t = jnp.pad(x.T.astype(cdtype), ((0, 0), (0, B_pad - B)))

    resident = lambda i: (0, 0)            # same block every step -> VMEM-resident
    operands = [x_t]
    in_specs = [pl.BlockSpec((Din, bm_eff), lambda i: (0, i))]
    for w, s in folded["hidden"]:
        operands += [w, s]
        in_specs += [pl.BlockSpec(w.shape, resident), pl.BlockSpec(s.shape, resident)]
    if has_out:
        w, b = folded["out"]
        operands += [w, b]
        in_specs += [pl.BlockSpec(w.shape, resident), pl.BlockSpec(b.shape, resident)]
        out_rows = 1
    else:
        out_rows = folded["hidden"][-1][0].shape[0]

    # Advisory cost estimate so XLA schedules the small custom call sensibly.
    flops, d_in = 0, Din
    for w, _ in folded["hidden"]:
        flops += 2 * B_pad * d_in * w.shape[0]
        d_in = w.shape[0]
    if has_out:
        flops += 2 * B_pad * d_in
    bytes_accessed = sum(int(o.size) * int(o.dtype.itemsize) for o in operands)
    bytes_accessed += out_rows * B_pad * 4

    kernel = functools.partial(_fused_mlp_kernel, n_hidden, has_out)

    out_t = pl.pallas_call(
        kernel,
        out_shape=jax.ShapeDtypeStruct((out_rows, B_pad), jnp.float32),
        grid_spec=pltpu.PrefetchScalarGridSpec(
            num_scalar_prefetch=0,
            grid=(grid,),
            in_specs=in_specs,
            out_specs=pl.BlockSpec((out_rows, bm_eff), lambda i: (0, i)),
        ),
        compiler_params=pltpu.CompilerParams(dimension_semantics=("parallel",)),
        cost_estimate=pl.CostEstimate(flops=flops, transcendentals=0,
                                      bytes_accessed=bytes_accessed),
    )(*operands)

    # Tiny (out_rows, B) slab -> (B, out_rows); negligible vs the old (B,128) slice.
    return out_t[:, :B].T


def mlp_reference(params, x, *, eps=1e-5):
    """Pure-JAX reference matching torch eval-mode math (unfolded BN)."""
    h = x
    for lyr in params["hidden"]:
        y = h @ lyr["w"] + lyr["b"]
        y = (y - lyr["running_mean"]) / jnp.sqrt(lyr["running_var"] + eps)
        y = y * lyr["gamma"] + lyr["beta"]
        h = jnp.maximum(y, 0.0)
    if params["out"] is not None:
        h = h @ params["out"]["w"] + params["out"]["b"]
    return h


# ----------------------------------- main ----------------------------------- #

if __name__ == "__main__":
    key = jax.random.PRNGKey(0)
    input_dim = 32
    embed_dims = (64, 32)
    dropout = 0.2  # unused in eval mode (identity)

    kp, kx1, kx2, kx3, kx4 = jax.random.split(key, 5)
    params = init_mlp_params(kp, input_dim, embed_dims, output_layer=True)

    folded_f32 = fold_mlp_params(params, compute_dtype=jnp.float32)
    folded_bf16 = fold_mlp_params(params, compute_dtype=jnp.bfloat16)

    fwd_f32 = jax.jit(lambda x: mlp_forward(folded_f32, x))
    fwd_bf16 = jax.jit(lambda x: mlp_forward(folded_bf16, x))

    # Case 1: small batch, f32 streaming, tight tolerance.
    x1 = jax.random.normal(kx1, (16, input_dim), jnp.float32)
    out1 = jax.block_until_ready(fwd_f32(x1))
    ref1 = mlp_reference(params, x1)
    assert out1.shape == (16, 1), out1.shape
    assert jnp.allclose(out1, ref1, atol=1e-4, rtol=1e-4), (
        f"max err {jnp.max(jnp.abs(out1 - ref1))}")

    # Case 2: ragged batch (exercises lane padding).
    x2 = jax.random.normal(kx2, (13, input_dim), jnp.float32)
    out2 = jax.block_until_ready(fwd_f32(x2))
    ref2 = mlp_reference(params, x2)
    assert out2.shape == (13, 1), out2.shape
    assert jnp.allclose(out2, ref2, atol=1e-4, rtol=1e-4), (
        f"max err {jnp.max(jnp.abs(out2 - ref2))}")

    # Case 3: multi-block parallel grid (bm=128 over 256 rows), f32.
    x3 = jax.random.normal(kx3, (256, input_dim), jnp.float32)
    out3 = jax.block_until_ready(
        jax.jit(lambda x: mlp_forward(folded_f32, x, bm=128))(x3))
    ref3 = mlp_reference(params, x3)
    assert out3.shape == (256, 1), out3.shape
    assert jnp.allclose(out3, ref3, atol=1e-4, rtol=1e-4), (
        f"max err {jnp.max(jnp.abs(out3 - ref3))}")

    # Case 4: bf16-streamed path (bandwidth optimization), loose tolerance.
    out4 = jax.block_until_ready(fwd_bf16(x3))
    assert out4.shape == (256, 1), out4.shape
    assert jnp.allclose(out4, ref3, atol=5e-2, rtol=5e-2), (
        f"max err {jnp.max(jnp.abs(out4 - ref3))}")

    # Case 5: output_layer=False path (lane-dense (d_last, B) output).
    params_no = init_mlp_params(jax.random.PRNGKey(1), input_dim, embed_dims,
                                output_layer=False)
    folded_no = fold_mlp_params(params_no, compute_dtype=jnp.float32)
    x5 = jax.random.normal(kx4, (16, input_dim), jnp.float32)
    out5 = jax.block_until_ready(mlp_forward(folded_no, x5))
    ref5 = mlp_reference(params_no, x5)
    assert out5.shape == (16, embed_dims[-1]), out5.shape
    assert jnp.allclose(out5, ref5, atol=1e-4, rtol=1e-4), (
        f"max err {jnp.max(jnp.abs(out5 - ref5))}")

    print("KERNEL_OK")
</pallas_src>

<mosaic_0001>
module attributes {stable_mosaic.version = 11 : i64} {
  func.func @_fused_mlp_kernel(%arg0: i32, %arg1: memref<32x128xf32, #tpu.memory_space<vmem>>, %arg2: memref<64x32xf32, #tpu.memory_space<vmem>>, %arg3: memref<64x1xf32, #tpu.memory_space<vmem>>, %arg4: memref<32x64xf32, #tpu.memory_space<vmem>>, %arg5: memref<32x1xf32, #tpu.memory_space<vmem>>, %arg6: memref<8x32xf32, #tpu.memory_space<vmem>>, %arg7: memref<1x1xf32, #tpu.memory_space<vmem>>, %arg8: memref<1x128xf32, #tpu.memory_space<vmem>>) attributes {dimension_semantics = [#tpu.dimension_semantics<parallel>], iteration_bounds = array<i64: 1>, scalar_prefetch = 0 : i64, scratch_operands = 0 : i64, tpu.core_type = #tpu.core_type<tc>, window_params = [{transform_indices = @transform_0, window_bounds = array<i64: 32, 128>}, {pipeline_mode = #tpu.pipeline_mode<synchronous>, transform_indices = @transform_1, window_bounds = array<i64: 64, 32>}, {pipeline_mode = #tpu.pipeline_mode<synchronous>, transform_indices = @transform_2, window_bounds = array<i64: 64, 1>}, {pipeline_mode = #tpu.pipeline_mode<synchronous>, transform_indices = @transform_3, window_bounds = array<i64: 32, 64>}, {pipeline_mode = #tpu.pipeline_mode<synchronous>, transform_indices = @transform_4, window_bounds = array<i64: 32, 1>}, {pipeline_mode = #tpu.pipeline_mode<synchronous>, transform_indices = @transform_5, window_bounds = array<i64: 8, 32>}, {pipeline_mode = #tpu.pipeline_mode<synchronous>, transform_indices = @transform_6, window_bounds = array<i64: 1, 1>}, {transform_indices = @transform_7, window_bounds = array<i64: 1, 128>}]} {
    %c0 = arith.constant 0 : index
    %c0_0 = arith.constant 0 : index
    %0 = vector.load %arg1[%c0, %c0_0] : memref<32x128xf32, #tpu.memory_space<vmem>>, vector<32x128xf32>
    %c0_1 = arith.constant 0 : index
    %c0_2 = arith.constant 0 : index
    %1 = vector.load %arg2[%c0_1, %c0_2] : memref<64x32xf32, #tpu.memory_space<vmem>>, vector<64x32xf32>
    %cst = arith.constant dense<0.000000e+00> : vector<64x128xf32>
    %2 = tpu.matmul %1, %0, %cst {dimension_numbers = #tpu.dot_dimension_numbers<[1], [0], [0], [1], [0, 0, 1, 1], [], []>} : vector<64x32xf32>, vector<32x128xf32>, vector<64x128xf32> -> vector<64x128xf32>
    %c0_3 = arith.constant 0 : index
    %c0_4 = arith.constant 0 : index
    %3 = vector.load %arg3[%c0_3, %c0_4] : memref<64x1xf32, #tpu.memory_space<vmem>>, vector<64x1xf32>
    %4 = vector.broadcast %3 : vector<64x1xf32> to vector<64x128xf32>
    %5 = arith.addf %2, %4 : vector<64x128xf32>
    %cst_5 = arith.constant 0.000000e+00 : f32
    %6 = vector.broadcast %cst_5 : f32 to vector<64x128xf32>
    %7 = arith.maximumf %5, %6 : vector<64x128xf32>
    %c0_6 = arith.constant 0 : index
    %c0_7 = arith.constant 0 : index
    %8 = vector.load %arg4[%c0_6, %c0_7] : memref<32x64xf32, #tpu.memory_space<vmem>>, vector<32x64xf32>
    %cst_8 = arith.constant dense<0.000000e+00> : vector<32x128xf32>
    %9 = tpu.matmul %8, %7, %cst_8 {dimension_numbers = #tpu.dot_dimension_numbers<[1], [0], [0], [1], [0, 0, 1, 1], [], []>} : vector<32x64xf32>, vector<64x128xf32>, vector<32x128xf32> -> vector<32x128xf32>
    %c0_9 = arith.constant 0 : index
    %c0_10 = arith.constant 0 : index
    %10 = vector.load %arg5[%c0_9, %c0_10] : memref<32x1xf32, #tpu.memory_space<vmem>>, vector<32x1xf32>
    %11 = vector.broadcast %10 : vector<32x1xf32> to vector<32x128xf32>
    %12 = arith.addf %9, %11 : vector<32x128xf32>
    %cst_11 = arith.constant 0.000000e+00 : f32
    %13 = vector.broadcast %cst_11 : f32 to vector<32x128xf32>
    %14 = arith.maximumf %12, %13 : vector<32x128xf32>
    %c0_12 = arith.constant 0 : index
    %c0_13 = arith.constant 0 : index
    %15 = vector.load %arg6[%c0_12, %c0_13] : memref<8x32xf32, #tpu.memory_space<vmem>>, vector<8x32xf32>
    %cst_14 = arith.constant dense<0.000000e+00> : vector<8x128xf32>
    %16 = tpu.matmul %15, %14, %cst_14 {dimension_numbers = #tpu.dot_dimension_numbers<[1], [0], [0], [1], [0, 0, 1, 1], [], []>} : vector<8x32xf32>, vector<32x128xf32>, vector<8x128xf32> -> vector<8x128xf32>
    %17 = vector.extract_strided_slice %16 {offsets = [0, 0], sizes = [1, 128], strides = [1, 1]} : vector<8x128xf32> to vector<1x128xf32>
    %c0_15 = arith.constant 0 : index
    %c0_16 = arith.constant 0 : index
    %18 = vector.load %arg7[%c0_15, %c0_16] : memref<1x1xf32, #tpu.memory_space<vmem>>, vector<1x1xf32>
    %19 = vector.broadcast %18 : vector<1x1xf32> to vector<1x128xf32>
    %20 = arith.addf %17, %19 : vector<1x128xf32>
    %c0_17 = arith.constant 0 : index
    %c0_18 = arith.constant 0 : index
    %21 = vector.load %arg8[%c0_17, %c0_18] : memref<1x128xf32, #tpu.memory_space<vmem>>, vector<1x128xf32>
    tpu.vector_store %arg8[%c0_17, %c0_18], %20 {strides = array<i32>} : memref<1x128xf32, #tpu.memory_space<vmem>>, vector<1x128xf32>,
    return
  }
  func.func @transform_0(%arg0: i32) -> (i32, i32) {
    %c0_i32 = arith.constant 0 : i32
    %c0_i32_0 = arith.constant 0 : i32
    return %c0_i32, %arg0 : i32, i32
  }
  func.func @transform_1(%arg0: i32) -> (i32, i32) {
    %c0_i32 = arith.constant 0 : i32
    %c0_i32_0 = arith.constant 0 : i32
    %c0_i32_1 = arith.constant 0 : i32
    return %c0_i32, %c0_i32_0 : i32, i32
  }
  func.func @transform_2(%arg0: i32) -> (i32, i32) {
    %c0_i32 = arith.constant 0 : i32
    %c0_i32_0 = arith.constant 0 : i32
    %c0_i32_1 = arith.constant 0 : i32
    return %c0_i32, %c0_i32_0 : i32, i32
  }
  func.func @transform_3(%arg0: i32) -> (i32, i32) {
    %c0_i32 = arith.constant 0 : i32
    %c0_i32_0 = arith.constant 0 : i32
    %c0_i32_1 = arith.constant 0 : i32
    return %c0_i32, %c0_i32_0 : i32, i32
  }
  func.func @transform_4(%arg0: i32) -> (i32, i32) {
    %c0_i32 = arith.constant 0 : i32
    %c0_i32_0 = arith.constant 0 : i32
    %c0_i32_1 = arith.constant 0 : i32
    return %c0_i32, %c0_i32_0 : i32, i32
  }
  func.func @transform_5(%arg0: i32) -> (i32, i32) {
    %c0_i32 = arith.constant 0 : i32
    %c0_i32_0 = arith.constant 0 : i32
    %c0_i32_1 = arith.constant 0 : i32
    return %c0_i32, %c0_i32_0 : i32, i32
  }
  func.func @transform_6(%arg0: i32) -> (i32, i32) {
    %c0_i32 = arith.constant 0 : i32
    %c0_i32_0 = arith.constant 0 : i32
    %c0_i32_1 = arith.constant 0 : i32
    return %c0_i32, %c0_i32_0 : i32, i32
  }
  func.func @transform_7(%arg0: i32) -> (i32, i32) {
    %c0_i32 = arith.constant 0 : i32
    %c0_i32_0 = arith.constant 0 : i32
    return %c0_i32, %arg0 : i32, i32
  }
}

</mosaic_0001>

<llo_original>
// kernel: _lambda_.1
$region0: #{_lambda_.1}
  #allocation0 [shape = 'u32[]', space=smem, size = 0x4, offset = 0x4, fixed_abs, tag = 'smem constant byte address 0x4 - core index']
  #allocation1 [shape = 'u32[72,128]{1,0:T(1,128)}', space=vmem, size = 0x9000, scoped, tag = 'internal scratch']
  #allocation2 [shape = 'f32[1,1]{1,0:T(1,128)S(1)}', space=vmem, size = 0x200, scoped, tag = 'scoped memory for _lambda_.1']
  %s0 = inlined_call_operand.vmem [shape: f32[32,128], index: 0, kind: input, shape index: {}]
  %s1 = inlined_call_operand.hbm [shape: f32[64,32], index: 1, kind: input, shape index: {}]
  %s2 = inlined_call_operand.vmem [shape: f32[64,1], index: 2, kind: input, shape index: {}]
  %s3 = inlined_call_operand.hbm [shape: f32[32,64], index: 3, kind: input, shape index: {}]
  %s4 = inlined_call_operand.vmem [shape: f32[32,1], index: 4, kind: input, shape index: {}]
  %s5 = inlined_call_operand.vmem [shape: f32[8,32], index: 5, kind: input, shape index: {}]
  %s6 = inlined_call_operand.<no memory space> [shape: f32[1,1], index: 6, kind: input, shape index: {}]
  %s7 = inlined_call_operand.vmem [shape: f32[1,128], index: 7, kind: output, shape index: {}]
  %s8 = sld [smem:[#allocation0]]
  $region46: #{_lambda_.1} parent=0
    _
  %s10 = ssub.s32 1, %s8
  %s11 = scalar_select 0, %s10, %s8
  %v12 = vstv %s6
  %13 = vst [vmem:[#allocation2] sm:$0x1] %v12
  $region1: #{_lambda_.1} parent=0
    #allocation3 [shape = 'u8[32768]{0}', space=vmem, size = 0x8000, scoped, tag = 'input window, operand 1, single buffered']
    #allocation4 [shape = 's32[1]{0}', space=sflag, size = 0x4, scoped, tag = 'scoped memory for _lambda_.1']
    #allocation5 [shape = 'u8[16384]{0}', space=vmem, size = 0x4000, scoped, tag = 'input window, operand 3, single buffered']
    #allocation6 [shape = 's32[1]{0}', space=sflag, size = 0x4, scoped, tag = 'scoped memory for _lambda_.1']
    %14 = vsyncpa [#allocation4], 0
    %15 = vsyncpa [#allocation6], 0
    // Predicated region
    $region2: #{_lambda_.1} parent=1 // pred_check
      _
    $region3: #{_lambda_.1} parent=1 // pred_check_branch
      %17 = sbr.rel (0) target = $region5
    $region4: #{_lambda_.1} parent=1 // pred_region
      _
    $region5: #{_lambda_.1} parent=1 // pred_fallthru
      _
    // Predicated region
    $region6: #{_lambda_.1} parent=1 // pred_check
      _
    $region7: #{_lambda_.1} parent=1 // pred_check_branch
      %19 = sbr.rel (0) target = $region9
    $region8: #{_lambda_.1} parent=1 // pred_region
      %21 = vsyncadd [#allocation4], 0
      %s22 = sshll.u32 %s1, 4
      %s23 = int_to_ptr.hbm [resolvable:$true] %s22
      %s24 = sshll.u32 [#allocation3], 4
      %s25 = int_to_ptr.vmem [resolvable:$true] %s24
      %30 = dma.hbm_to_vmem [thread:$0]  %s23, 1024, %s25, [#allocation4], 128, 128, 8
    $region9: #{_lambda_.1} parent=1 // pred_fallthru
      _
    // Predicated region
    $region10: #{_lambda_.1} parent=1 // pred_check
      _
    $region11: #{_lambda_.1} parent=1 // pred_check_branch
      %32 = sbr.rel (0) target = $region13
    $region12: #{_lambda_.1} parent=1 // pred_region
      _
    $region13: #{_lambda_.1} parent=1 // pred_fallthru
      _
    // Predicated region
    $region14: #{_lambda_.1} parent=1 // pred_check
      _
    $region15: #{_lambda_.1} parent=1 // pred_check_branch
      %34 = sbr.rel (0) target = $region17
    $region16: #{_lambda_.1} parent=1 // pred_region
      %36 = vsyncadd [#allocation6], 0
      %s37 = sshll.u32 %s3, 4
      %s38 = int_to_ptr.hbm [resolvable:$true] %s37
      %s39 = sshll.u32 [#allocation5], 4
      %s40 = int_to_ptr.vmem [resolvable:$true] %s39
      %45 = dma.hbm_to_vmem [thread:$0]  %s38, 512, %s40, [#allocation6], 128, 128, 8
    $region17: #{_lambda_.1} parent=1 // pred_fallthru
      _
    // Predicated region
    $region18: #{_lambda_.1} parent=1 // pred_check
      _
    $region19: #{_lambda_.1} parent=1 // pred_check_branch
      %47 = sbr.rel (0) target = $region21
    $region20: #{_lambda_.1} parent=1 // pred_region
      _
    $region21: #{_lambda_.1} parent=1 // pred_fallthru
      _
    // Predicated region
    $region22: #{_lambda_.1} parent=1 // pred_check
      _
    $region23: #{_lambda_.1} parent=1 // pred_check_branch
      %49 = sbr.rel (0) target = $region25
    $region24: #{_lambda_.1} parent=1 // pred_region
      _
    $region25: #{_lambda_.1} parent=1 // pred_fallthru
      _
    // Predicated region
    $region26: #{_lambda_.1} parent=1 // pred_check
      _
    $region27: #{_lambda_.1} parent=1 // pred_check_branch
      %51 = sbr.rel (0) target = $region29
    $region28: #{_lambda_.1} parent=1 // pred_region
      _
    $region29: #{_lambda_.1} parent=1 // pred_fallthru
      _
    // Predicated region
    $region30: #{_lambda_.1} parent=1 // pred_check
      _
    $region31: #{_lambda_.1} parent=1 // pred_check_branch
      %53 = sbr.rel (0) target = $region33
    $region32: #{_lambda_.1} parent=1 // pred_region
      %55 = dma.done [#allocation4], 1024
    $region33: #{_lambda_.1} parent=1 // pred_fallthru
      _
    // Predicated region
    $region34: #{_lambda_.1} parent=1 // pred_check
      _
    $region35: #{_lambda_.1} parent=1 // pred_check_branch
      %57 = sbr.rel (0) target = $region37
    $region36: #{_lambda_.1} parent=1 // pred_region
      %59 = dma.done [#allocation6], 512
    $region37: #{_lambda_.1} parent=1 // pred_fallthru
      _
    %v60 = vld [vmem:[%s0] sm:$0xff]
    %v61 = vld [vmem:[%s0 + $0x8] sm:$0xff]
    %v62 = vld [vmem:[%s0 + $0x10] sm:$0xff]
    %v63 = vld [vmem:[%s0 + $0x18] sm:$0xff]
    %v64 = vld [vmem:[#allocation3] sm:$0xff]
    %v65 = vld [vmem:[#allocation3 + $0x8] sm:$0xff]
    %v66 = vld [vmem:[#allocation3 + $0x10] sm:$0xff]
    %v67 = vld [vmem:[#allocation3 + $0x18] sm:$0xff]
    %v68 = vld [vmem:[#allocation3 + $0x20] sm:$0xff]
    %v69 = vld [vmem:[#allocation3 + $0x28] sm:$0xff]
    %v70 = vld [vmem:[#allocation3 + $0x30] sm:$0xff]
    %v71 = vld [vmem:[#allocation3 + $0x38] sm:$0xff]
    %v72 = vld [vmem:[%s2] sm:$0xff]
    %v73 = vld [vmem:[%s2 + $0x8] sm:$0xff]
    %v74 = vld [vmem:[%s2 + $0x10] sm:$0xff]
    %v75 = vld [vmem:[%s2 + $0x18] sm:$0xff]
    %v76 = vld [vmem:[%s2 + $0x20] sm:$0xff]
    %v77 = vld [vmem:[%s2 + $0x28] sm:$0xff]
    %v78 = vld [vmem:[%s2 + $0x30] sm:$0xff]
    %v79 = vld [vmem:[%s2 + $0x38] sm:$0xff]
    %81 = vset.pattern.permute.xlu0 0
    %82 = vperm.xlu0 %81, %v72
    %v83 = vpop.permute.xlu0 %82
    %86 = vset.pattern.permute.xlu0 0
    %87 = vperm.xlu0 %86, %v73
    %v88 = vpop.permute.xlu0 %87
    %91 = vset.pattern.permute.xlu0 0
    %92 = vperm.xlu0 %91, %v74
    %v93 = vpop.permute.xlu0 %92
    %96 = vset.pattern.permute.xlu0 0
    %97 = vperm.xlu0 %96, %v75
    %v98 = vpop.permute.xlu0 %97
    %101 = vset.pattern.permute.xlu0 0
    %102 = vperm.xlu0 %101, %v76
    %v103 = vpop.permute.xlu0 %102
    %106 = vset.pattern.permute.xlu0 0
    %107 = vperm.xlu0 %106, %v77
    %v108 = vpop.permute.xlu0 %107
    %111 = vset.pattern.permute.xlu0 0
    %112 = vperm.xlu0 %111, %v78
    %v113 = vpop.permute.xlu0 %112
    %116 = vset.pattern.permute.xlu0 0
    %117 = vperm.xlu0 %116, %v79
    %v118 = vpop.permute.xlu0 %117
    %vm120 = vcmask 261120
    %v122 = vsel %vm120, %v64, 0
    %v125 = vsel %vm120, %v65, 0
    %v128 = vsel %vm120, %v66, 0
    %v131 = vsel %vm120, %v67, 0
    %v134 = vsel %vm120, %v68, 0
    %v137 = vsel %vm120, %v69, 0
    %v140 = vsel %vm120, %v70, 0
    %v143 = vsel %vm120, %v71, 0
    %145 = vmatpush.msra.mxu0 0.0
    %146 = vmatpush.msra.mxu0 0.0
    %147 = vmatpush.msra.mxu0 0.0
    %148 = vmatpush.msra.mxu0 0.0
    %149 = vmatpush.msra.mxu0 0.0
    %150 = vmatpush.msra.mxu0 0.0
    %151 = vmatpush.msra.mxu0 0.0
    %152 = vmatpush.msra.mxu0 0.0
    %153 = vmatpush.msra.mxu0 0.0
    %154 = vmatpush.msra.mxu0 0.0
    %155 = vmatpush.msra.mxu0 0.0
    %156 = vmatpush.msra.mxu0 0.0
    %157 = vmatpush.msra.mxu0 %v63
    %158 = vmatpush.msra.mxu0 %v62
    %159 = vmatpush.msra.mxu0 %v61
    %160 = vmatpush.msra.mxu0 %v60
    %161 = vmatmul.f32.gmra.mxu0 %v122
    %v162 = vpop.f32.mrf.mxu0
    %v163 = vadd.f32 %v83, %v162
    %164 = vmatmul.f32.gmra.mxu0 %v125
    %v165 = vpop.f32.mrf.mxu0
    %v166 = vadd.f32 %v88, %v165
    %167 = vmatmul.f32.gmra.mxu0 %v128
    %v168 = vpop.f32.mrf.mxu0
    %v169 = vadd.f32 %v93, %v168
    %170 = vmatmul.f32.gmra.mxu0 %v131
    %v171 = vpop.f32.mrf.mxu0
    %v172 = vadd.f32 %v98, %v171
    %173 = vmatmul.f32.gmra.mxu0 %v134
    %v174 = vpop.f32.mrf.mxu0
    %v175 = vadd.f32 %v103, %v174
    %176 = vmatmul.f32.gmra.mxu0 %v137
    %v177 = vpop.f32.mrf.mxu0
    %v178 = vadd.f32 %v108, %v177
    %179 = vmatmul.f32.gmra.mxu0 %v140
    %v180 = vpop.f32.mrf.mxu0
    %v181 = vadd.f32 %v113, %v180
    %182 = vmatmul.f32.gmra.mxu0 %v143
    %v183 = vpop.f32.mrf.mxu0
    %v184 = vadd.f32 %v118, %v183
    %185 = vdwg.mxu0
    %v186 = vmax.f32 %v163, 0.0
    %v187 = vmax.f32 %v166, 0.0
    %v188 = vmax.f32 %v169, 0.0
    %v189 = vmax.f32 %v172, 0.0
    %v190 = vmax.f32 %v175, 0.0
    %v191 = vmax.f32 %v178, 0.0
    %v192 = vmax.f32 %v181, 0.0
    %v193 = vmax.f32 %v184, 0.0
    %v194 = vld [vmem:[#allocation5] sm:$0xff]
    %v195 = vld [vmem:[#allocation5 + $0x8] sm:$0xff]
    %v196 = vld [vmem:[#allocation5 + $0x10] sm:$0xff]
    %v197 = vld [vmem:[#allocation5 + $0x18] sm:$0xff]
    %v198 = vld [vmem:[%s4] sm:$0xff]
    %v199 = vld [vmem:[%s4 + $0x8] sm:$0xff]
    %v200 = vld [vmem:[%s4 + $0x10] sm:$0xff]
    %v201 = vld [vmem:[%s4 + $0x18] sm:$0xff]
    %203 = vset.pattern.permute.xlu0 0
    %204 = vperm.xlu0 %203, %v198
    %v205 = vpop.permute.xlu0 %204
    %208 = vset.pattern.permute.xlu0 0
    %209 = vperm.xlu0 %208, %v199
    %v210 = vpop.permute.xlu0 %209
    %213 = vset.pattern.permute.xlu0 0
    %214 = vperm.xlu0 %213, %v200
    %v215 = vpop.permute.xlu0 %214
    %218 = vset.pattern.permute.xlu0 0
    %219 = vperm.xlu0 %218, %v201
    %v220 = vpop.permute.xlu0 %219
    %vm222 = vcmask 523264
    %v224 = vsel %vm222, %v194, 0
    %v227 = vsel %vm222, %v195, 0
    %v230 = vsel %vm222, %v196, 0
    %v233 = vsel %vm222, %v197, 0
    %235 = vmatpush.msra.mxu0 0.0
    %236 = vmatpush.msra.mxu0 0.0
    %237 = vmatpush.msra.mxu0 0.0
    %238 = vmatpush.msra.mxu0 0.0
    %239 = vmatpush.msra.mxu0 0.0
    %240 = vmatpush.msra.mxu0 0.0
    %241 = vmatpush.msra.mxu0 0.0
    %242 = vmatpush.msra.mxu0 0.0
    %243 = vmatpush.msra.mxu0 %v193
    %244 = vmatpush.msra.mxu0 %v192
    %245 = vmatpush.msra.mxu0 %v191
    %246 = vmatpush.msra.mxu0 %v190
    %247 = vmatpush.msra.mxu0 %v189
    %248 = vmatpush.msra.mxu0 %v188
    %249 = vmatpush.msra.mxu0 %v187
    %250 = vmatpush.msra.mxu0 %v186
    %251 = vmatmul.f32.gmra.mxu0 %v224
    %v252 = vpop.f32.mrf.mxu0
    %v253 = vadd.f32 %v205, %v252
    %254 = vmatmul.f32.gmra.mxu0 %v227
    %v255 = vpop.f32.mrf.mxu0
    %v256 = vadd.f32 %v210, %v255
    %257 = vmatmul.f32.gmra.mxu0 %v230
    %v258 = vpop.f32.mrf.mxu0
    %v259 = vadd.f32 %v215, %v258
    %260 = vmatmul.f32.gmra.mxu0 %v233
    %v261 = vpop.f32.mrf.mxu0
    %v262 = vadd.f32 %v220, %v261
    %263 = vdwg.mxu0
    %v264 = vmax.f32 %v253, 0.0
    %v265 = vmax.f32 %v256, 0.0
    %v266 = vmax.f32 %v259, 0.0
    %v267 = vmax.f32 %v262, 0.0
    %v268 = vld [vmem:[%s5] sm:$0xff]
    %v270 = vsel %vm120, %v268, 0
    %272 = vmatpush.msra.mxu0 0.0
    %273 = vmatpush.msra.mxu0 0.0
    %274 = vmatpush.msra.mxu0 0.0
    %275 = vmatpush.msra.mxu0 0.0
    %276 = vmatpush.msra.mxu0 0.0
    %277 = vmatpush.msra.mxu0 0.0
    %278 = vmatpush.msra.mxu0 0.0
    %279 = vmatpush.msra.mxu0 0.0
    %280 = vmatpush.msra.mxu0 0.0
    %281 = vmatpush.msra.mxu0 0.0
    %282 = vmatpush.msra.mxu0 0.0
    %283 = vmatpush.msra.mxu0 0.0
    %284 = vmatpush.msra.mxu0 %v267
    %285 = vmatpush.msra.mxu0 %v266
    %286 = vmatpush.msra.mxu0 %v265
    %287 = vmatpush.msra.mxu0 %v264
    %288 = vmatmul.f32.gmra.mxu0 %v270
    %v289 = vpop.f32.mrf.mxu0
    %v290 = vadd.f32 0.0, %v289
    %291 = vdwg.mxu0
    %v292 = vld [vmem:[#allocation2] sm:$0x1]
    %294 = vset.pattern.permute.xlu0 0
    %295 = vperm.xlu0 %294, %v292
    %v296 = vpop.permute.xlu0 %295
    %v298 = vperm.slane %v296, 0
    %v299 = vadd.f32 %v290, %v298
    %300 = vst [vmem:[%s7] sm:$0x1] %v299
    // Predicated region
    $region38: #{_lambda_.1} parent=1 // pred_check
      _
    $region39: #{_lambda_.1} parent=1 // pred_check_branch
      %302 = sbr.rel (0) target = $region41
    $region40: #{_lambda_.1} parent=1 // pred_region
      _
    $region41: #{_lambda_.1} parent=1 // pred_fallthru
      _
    // Predicated region
    $region42: #{_lambda_.1} parent=1 // pred_check
      _
    $region43: #{_lambda_.1} parent=1 // pred_check_branch
      %304 = sbr.rel (0) target = $region45
    $region44: #{_lambda_.1} parent=1 // pred_region
      _
    $region45: #{_lambda_.1} parent=1 // pred_fallthru
      _
    %305 = vsyncpa [#allocation4], 1
    %306 = vsyncpa [#allocation6], 1

</llo_original>
